<compile_context>
chip_gen: v6e
topology: v6e:2x2x1
jax: 0.10.0
libtpu: 0.0.40
codegen_flags: <defaults>
</compile_context>

<pallas_src>
import functools

import jax
import jax.numpy as jnp
from jax import lax
from jax.experimental import pallas as pl
from jax.experimental.pallas import tpu as pltpu


def _tcn_kernel(x_ref, w_ref, b_ref, o_ref, *, kernel_size, dilations, mode,
                mxu_dtype):
    """x_ref: (1, C, L); w_ref: (n_layers, K, C, C); b_ref: (n_layers, C, 1)."""
    K = kernel_size
    _, C, L = x_ref.shape

    # Hoisted loop invariant shared by all layers.
    lane = lax.broadcasted_iota(jnp.int32, (1, L), 1)

    x = x_ref[0].astype(jnp.float32)  # (C, L) residual stream, kept in f32

    for li, dil in enumerate(dilations):
        w_l = w_ref[li].astype(jnp.float32)  # (K, C, C), tap-major
        b = b_ref[li].astype(jnp.float32)    # (C, 1)

        # Hoisted per layer: the conv body is traced/inlined twice, and JAX
        # does not CSE broadcast_in_dim, so broadcast bias / masks / weight
        # casts exactly once here.
        b_full = jnp.broadcast_to(b, (C, L))
        shifts = [(K - 1 - j) * dil for j in range(K)]
        masks = [jnp.broadcast_to(lane >= s, (C, L)) for s in shifts]
        if mode == "mxu_fused":
            w_fused = jnp.concatenate([w_l[j] for j in range(K)], axis=1)
            w_fused = w_fused.astype(mxu_dtype)        # (C, K*C)
        elif mode == "mxu_per_tap":
            w_taps = [w_l[j].astype(mxu_dtype) for j in range(K)]

        def shifted(z, j):
            # causal right-shift by shifts[j] with zero fill: lane rotate+mask
            s = shifts[j]
            if s == 0:
                return z
            if s >= L:
                return jnp.zeros_like(z)
            return jnp.where(masks[j], pltpu.roll(z, s, 1), 0.0)

        def conv(z):
            # y[:, t] = b + sum_j W_j @ z[:, t - (K-1-j)*dil]  (0 if t < shift)
            if mode == "mxu_per_tap":
                # No (K*C, L) concat buffer: accumulate K (C,C)x(C,L) MXU
                # matmuls with bf16 operands and f32 accumulation.
                y = b_full
                for j in range(K):
                    zj = shifted(z, j).astype(mxu_dtype)
                    y = y + jnp.dot(w_taps[j], zj,
                                    preferred_element_type=jnp.float32)
                return y
            if mode == "mxu_fused":
                # One fused (C, K*C) x (K*C, L) matmul fills the MXU width
                # even for small C (e.g. K*C = 128 on v5e).
                zk = jnp.concatenate([shifted(z, j) for j in range(K)], axis=0)
                return b_full + jnp.dot(w_fused, zk.astype(mxu_dtype),
                                        preferred_element_type=jnp.float32)
            # "vpu": tiny contraction, broadcast-FMA + sublane reduce,
            # exact f32, leaves the MXU idle on purpose.
            y = b_full
            for j in range(K):
                zj = shifted(z, j)
                y = y + jnp.sum(w_l[j][:, :, None] * zj[None, :, :], axis=1)
            return y

        h = jnp.maximum(conv(x), 0.0)
        # conv1 is conv2 in the reference module: same weights applied twice.
        h = jnp.maximum(conv(h), 0.0)
        x = h + x

    o_ref[0] = x.astype(o_ref.dtype)


def _choose_mode(C, K, vpu_threshold, per_tap_min_c):
    if C * K <= vpu_threshold:
        return "vpu"
    if C >= per_tap_min_c:
        return "mxu_per_tap"
    return "mxu_fused"


def _vmem_limit_bytes(C, L, K, n_layers, mode):
    """Working-set estimate for the fused kernel, with headroom."""
    f32 = 4
    act = (3 + 2 * K) * C * L * f32            # x, h, shifted parts, zk/acc
    if mode == "vpu":
        act += C * C * L * f32                 # broadcast-multiply intermediate
    masks = K * C * L * f32                    # hoisted (C, L) shift masks
    io = 4 * C * L * f32                       # 2x double-buffered in/out blocks
    wts = 2 * n_layers * K * C * C * f32       # double-buffered weight stack
    bias = 2 * n_layers * C * 128 * f32
    need = int(1.4 * (act + masks + io + wts + bias)) + (2 << 20)
    cap = 64 << 20                             # v7x physical per-TC VMEM
    try:
        cap = int(pltpu.get_tpu_info().vmem_capacity_bytes * 0.9)
    except Exception:
        pass
    return max(32 << 20, min(need, cap))


def tcn_forward(x, params, kernel_size=2, *, vpu_threshold=32,
                per_tap_min_c=128, mxu_operand_dtype=jnp.bfloat16):
    """x: (N, C, L); params: list of (w (K, C, C), b (C, 1)) per layer."""
    N, C, L = x.shape
    K = kernel_size
    n_layers = len(params)
    dilations = tuple(2 ** i for i in range(n_layers))

    # Host-side layout plumbing: pad channels to the f32 sublane granule (8)
    # and time to the lane granule (128) so every VMEM tile is lane/sublane
    # dense (unmasked vst). Zero padding preserves semantics: padded output
    # channels have zero weights/bias (relu(0)=0, residual adds 0) and the
    # conv is causal, so right-padded time never leaks into real outputs.
    Cp = -(-C // 8) * 8
    Lp = -(-L // 128) * 128
    xp = jnp.pad(x, ((0, 0), (0, Cp - C), (0, Lp - L)))

    w_stack = jnp.stack([
        jnp.pad(w, ((0, 0), (0, Cp - C), (0, Cp - C))) for (w, _) in params
    ])  # (n_layers, K, Cp, Cp), tap-major so the kernel never lane-slices
    b_stack = jnp.stack([
        jnp.pad(b, ((0, Cp - C), (0, 0))) for (_, b) in params
    ])  # (n_layers, Cp, 1)

    mode = _choose_mode(Cp, K, vpu_threshold, per_tap_min_c)
    vmem_limit = _vmem_limit_bytes(Cp, Lp, K, n_layers, mode)

    kern = functools.partial(_tcn_kernel, kernel_size=K, dilations=dilations,
                             mode=mode, mxu_dtype=mxu_operand_dtype)
    out = pl.pallas_call(
        kern,
        out_shape=jax.ShapeDtypeStruct((N, Cp, Lp), x.dtype),
        grid_spec=pltpu.PrefetchScalarGridSpec(
            num_scalar_prefetch=0,
            grid=(N,),
            in_specs=[
                pl.BlockSpec((1, Cp, Lp), lambda n: (n, 0, 0)),
                pl.BlockSpec((n_layers, K, Cp, Cp), lambda n: (0, 0, 0, 0)),
                pl.BlockSpec((n_layers, Cp, 1), lambda n: (0, 0, 0)),
            ],
            out_specs=pl.BlockSpec((1, Cp, Lp), lambda n: (n, 0, 0)),
        ),
        compiler_params=pltpu.CompilerParams(
            dimension_semantics=("parallel",),
            vmem_limit_bytes=vmem_limit,
        ),
    )(xp, w_stack, b_stack)
    return out[:, :C, :L]


def init_tcn_params(key, num_inputs, num_channels, kernel_size=2):
    """Deterministic synthetic init (PyTorch Conv1d-style uniform bounds)."""
    params = []
    for i, out_c in enumerate(num_channels):
        in_c = num_inputs if i == 0 else num_channels[i - 1]
        # Reference module requires in_c == out_c (residual add + shared conv).
        assert in_c == out_c
        key, kw, kb = jax.random.split(key, 3)
        bound = 1.0 / float(jnp.sqrt(in_c * kernel_size))
        w = jax.random.uniform(
            kw, (kernel_size, out_c, in_c), jnp.float32, -bound, bound
        )
        b = jax.random.uniform(kb, (out_c, 1), jnp.float32, -bound, bound)
        params.append((w, b))
    return params


# --- pure-JAX reference (for correctness check only) ---
def _ref_residual_block(x, w, b, dilation, kernel_size):
    N, C, L = x.shape

    def conv(z):
        y = jnp.broadcast_to(b[None], (N, C, L))
        for j in range(kernel_size):
            s = (kernel_size - 1 - j) * dilation
            zs = z if s == 0 else jnp.pad(z, ((0, 0), (0, 0), (s, 0)))[:, :, :L]
            y = y + jnp.einsum(
                "oc,ncl->nol", w[j], zs, precision=lax.Precision.HIGHEST
            )
        return y

    h = jax.nn.relu(conv(x))
    h = jax.nn.relu(conv(h))
    return h + x


def _ref_tcn(x, params, kernel_size):
    y = x
    for i, (w, b) in enumerate(params):
        y = _ref_residual_block(y, w, b, 2 ** i, kernel_size)
    return y


if __name__ == "__main__":
    key = jax.random.PRNGKey(0)
    kernel_size = 2

    # (N, C, L, n_layers, atol/rtol) — exercises all three contraction paths:
    #   C=8   -> VPU path (exact f32, tight tolerance)
    #   C=64  -> fused K*C=128 MXU matmul, bf16 operands
    #   C=128 -> per-tap MXU matmuls (no zk concat), bf16 operands
    configs = [
        (2, 8, 128, 2, 1e-4),
        (1, 64, 128, 2, 5e-2),
        (1, 128, 256, 1, 5e-2),
    ]

    for N, C, L, n_layers, tol in configs:
        key, kx, kp = jax.random.split(key, 3)
        x = jax.random.normal(kx, (N, C, L), jnp.float32)
        params = init_tcn_params(kp, C, [C] * n_layers, kernel_size=kernel_size)

        y = tcn_forward(x, params, kernel_size=kernel_size)
        y = jax.block_until_ready(y)

        y_ref = _ref_tcn(x, params, kernel_size)
        assert y.shape == (N, C, L)
        assert jnp.allclose(y, y_ref, atol=tol, rtol=tol), (
            f"mismatch vs reference for config N={N} C={C} L={L}"
        )

    print("KERNEL_OK")
</pallas_src>

<mosaic_0001>
module attributes {stable_mosaic.version = 11 : i64} {
  func.func @_tcn_kernel(%arg0: i32, %arg1: memref<1x8x128xf32, #tpu.memory_space<vmem>>, %arg2: memref<2x2x8x8xf32, #tpu.memory_space<vmem>>, %arg3: memref<2x8x1xf32, #tpu.memory_space<vmem>>, %arg4: memref<1x8x128xf32, #tpu.memory_space<vmem>>) attributes {dimension_semantics = [#tpu.dimension_semantics<parallel>], iteration_bounds = array<i64: 2>, scalar_prefetch = 0 : i64, scratch_operands = 0 : i64, tpu.core_type = #tpu.core_type<tc>, window_params = [{transform_indices = @transform_0, window_bounds = array<i64: 1, 8, 128>}, {pipeline_mode = #tpu.pipeline_mode<synchronous>, transform_indices = @transform_1, window_bounds = array<i64: 2, 2, 8, 8>}, {pipeline_mode = #tpu.pipeline_mode<synchronous>, transform_indices = @transform_2, window_bounds = array<i64: 2, 8, 1>}, {transform_indices = @transform_3, window_bounds = array<i64: 1, 8, 128>}]} {
    %0 = tpu.iota {dimensions = array<i32: 1>} : vector<1x128xi32>
    %c0 = arith.constant 0 : index
    %c0_0 = arith.constant 0 : index
    %c0_1 = arith.constant 0 : index
    %1 = vector.load %arg1[%c0, %c0_0, %c0_1] : memref<1x8x128xf32, #tpu.memory_space<vmem>>, vector<1x8x128xf32>
    %2 = vector.shape_cast %1 : vector<1x8x128xf32> to vector<8x128xf32>
    %c0_2 = arith.constant 0 : index
    %c0_3 = arith.constant 0 : index
    %c0_4 = arith.constant 0 : index
    %c0_5 = arith.constant 0 : index
    %3 = vector.load %arg2[%c0_2, %c0_3, %c0_4, %c0_5] : memref<2x2x8x8xf32, #tpu.memory_space<vmem>>, vector<1x2x8x8xf32>
    %4 = vector.shape_cast %3 : vector<1x2x8x8xf32> to vector<2x8x8xf32>
    %c0_6 = arith.constant 0 : index
    %c0_7 = arith.constant 0 : index
    %c0_8 = arith.constant 0 : index
    %5 = vector.load %arg3[%c0_6, %c0_7, %c0_8] : memref<2x8x1xf32, #tpu.memory_space<vmem>>, vector<1x8x1xf32>
    %6 = vector.shape_cast %5 : vector<1x8x1xf32> to vector<8x1xf32>
    %7 = vector.shape_cast %6 : vector<8x1xf32> to vector<8x1xf32>
    %8 = vector.broadcast %7 : vector<8x1xf32> to vector<8x128xf32>
    %c1_i32 = arith.constant 1 : i32
    %9 = vector.broadcast %c1_i32 : i32 to vector<1x128xi32>
    %10 = arith.cmpi sge, %0, %9 : vector<1x128xi32>
    %11 = vector.shape_cast %10 : vector<1x128xi1> to vector<1x128xi1>
    %12 = vector.broadcast %11 : vector<1x128xi1> to vector<8x128xi1>
    %c1_i32_9 = arith.constant 1 : i32
    %13 = tpu.dynamic_rotate %2 by %c1_i32_9 dim 1 : vector<8x128xf32>, i32 -> vector<8x128xf32>
    %cst = arith.constant 0.000000e+00 : f32
    %14 = vector.broadcast %cst : f32 to vector<8x128xf32>
    %15 = arith.select %12, %13, %14 : vector<8x128xi1>, vector<8x128xf32>
    %16 = vector.extract_strided_slice %4 {offsets = [0, 0, 0], sizes = [1, 8, 8], strides = [1, 1, 1]} : vector<2x8x8xf32> to vector<1x8x8xf32>
    %17 = vector.shape_cast %16 : vector<1x8x8xf32> to vector<8x8xf32>
    %18 = vector.shape_cast %17 : vector<8x8xf32> to vector<8x8x1xf32>
    %19 = vector.shape_cast %15 : vector<8x128xf32> to vector<1x8x128xf32>
    %20 = vector.broadcast %18 : vector<8x8x1xf32> to vector<8x8x128xf32>
    %21 = vector.broadcast %19 : vector<1x8x128xf32> to vector<8x8x128xf32>
    %22 = arith.mulf %20, %21 : vector<8x8x128xf32>
    %cst_10 = arith.constant dense<0.000000e+00> : vector<8x128xf32>
    %23 = vector.multi_reduction <add>, %22, %cst_10 [1] : vector<8x8x128xf32> to vector<8x128xf32>
    %24 = arith.addf %8, %23 : vector<8x128xf32>
    %25 = vector.extract_strided_slice %4 {offsets = [1, 0, 0], sizes = [1, 8, 8], strides = [1, 1, 1]} : vector<2x8x8xf32> to vector<1x8x8xf32>
    %26 = vector.shape_cast %25 : vector<1x8x8xf32> to vector<8x8xf32>
    %27 = vector.shape_cast %26 : vector<8x8xf32> to vector<8x8x1xf32>
    %28 = vector.shape_cast %2 : vector<8x128xf32> to vector<1x8x128xf32>
    %29 = vector.broadcast %27 : vector<8x8x1xf32> to vector<8x8x128xf32>
    %30 = vector.broadcast %28 : vector<1x8x128xf32> to vector<8x8x128xf32>
    %31 = arith.mulf %29, %30 : vector<8x8x128xf32>
    %cst_11 = arith.constant dense<0.000000e+00> : vector<8x128xf32>
    %32 = vector.multi_reduction <add>, %31, %cst_11 [1] : vector<8x8x128xf32> to vector<8x128xf32>
    %33 = arith.addf %24, %32 : vector<8x128xf32>
    %cst_12 = arith.constant 0.000000e+00 : f32
    %34 = vector.broadcast %cst_12 : f32 to vector<8x128xf32>
    %35 = arith.maximumf %33, %34 : vector<8x128xf32>
    %c1_i32_13 = arith.constant 1 : i32
    %36 = tpu.dynamic_rotate %35 by %c1_i32_13 dim 1 : vector<8x128xf32>, i32 -> vector<8x128xf32>
    %cst_14 = arith.constant 0.000000e+00 : f32
    %37 = vector.broadcast %cst_14 : f32 to vector<8x128xf32>
    %38 = arith.select %12, %36, %37 : vector<8x128xi1>, vector<8x128xf32>
    %39 = vector.extract_strided_slice %4 {offsets = [0, 0, 0], sizes = [1, 8, 8], strides = [1, 1, 1]} : vector<2x8x8xf32> to vector<1x8x8xf32>
    %40 = vector.shape_cast %39 : vector<1x8x8xf32> to vector<8x8xf32>
    %41 = vector.shape_cast %40 : vector<8x8xf32> to vector<8x8x1xf32>
    %42 = vector.shape_cast %38 : vector<8x128xf32> to vector<1x8x128xf32>
    %43 = vector.broadcast %41 : vector<8x8x1xf32> to vector<8x8x128xf32>
    %44 = vector.broadcast %42 : vector<1x8x128xf32> to vector<8x8x128xf32>
    %45 = arith.mulf %43, %44 : vector<8x8x128xf32>
    %cst_15 = arith.constant dense<0.000000e+00> : vector<8x128xf32>
    %46 = vector.multi_reduction <add>, %45, %cst_15 [1] : vector<8x8x128xf32> to vector<8x128xf32>
    %47 = arith.addf %8, %46 : vector<8x128xf32>
    %48 = vector.extract_strided_slice %4 {offsets = [1, 0, 0], sizes = [1, 8, 8], strides = [1, 1, 1]} : vector<2x8x8xf32> to vector<1x8x8xf32>
    %49 = vector.shape_cast %48 : vector<1x8x8xf32> to vector<8x8xf32>
    %50 = vector.shape_cast %49 : vector<8x8xf32> to vector<8x8x1xf32>
    %51 = vector.shape_cast %35 : vector<8x128xf32> to vector<1x8x128xf32>
    %52 = vector.broadcast %50 : vector<8x8x1xf32> to vector<8x8x128xf32>
    %53 = vector.broadcast %51 : vector<1x8x128xf32> to vector<8x8x128xf32>
    %54 = arith.mulf %52, %53 : vector<8x8x128xf32>
    %cst_16 = arith.constant dense<0.000000e+00> : vector<8x128xf32>
    %55 = vector.multi_reduction <add>, %54, %cst_16 [1] : vector<8x8x128xf32> to vector<8x128xf32>
    %56 = arith.addf %47, %55 : vector<8x128xf32>
    %cst_17 = arith.constant 0.000000e+00 : f32
    %57 = vector.broadcast %cst_17 : f32 to vector<8x128xf32>
    %58 = arith.maximumf %56, %57 : vector<8x128xf32>
    %59 = arith.addf %58, %2 : vector<8x128xf32>
    %c1 = arith.constant 1 : index
    %c0_18 = arith.constant 0 : index
    %c0_19 = arith.constant 0 : index
    %c0_20 = arith.constant 0 : index
    %60 = vector.load %arg2[%c1, %c0_18, %c0_19, %c0_20] : memref<2x2x8x8xf32, #tpu.memory_space<vmem>>, vector<1x2x8x8xf32>
    %61 = vector.shape_cast %60 : vector<1x2x8x8xf32> to vector<2x8x8xf32>
    %c1_21 = arith.constant 1 : index
    %c0_22 = arith.constant 0 : index
    %c0_23 = arith.constant 0 : index
    %62 = vector.load %arg3[%c1_21, %c0_22, %c0_23] : memref<2x8x1xf32, #tpu.memory_space<vmem>>, vector<1x8x1xf32>
    %63 = vector.shape_cast %62 : vector<1x8x1xf32> to vector<8x1xf32>
    %64 = vector.shape_cast %63 : vector<8x1xf32> to vector<8x1xf32>
    %65 = vector.broadcast %64 : vector<8x1xf32> to vector<8x128xf32>
    %c2_i32 = arith.constant 2 : i32
    %66 = vector.broadcast %c2_i32 : i32 to vector<1x128xi32>
    %67 = arith.cmpi sge, %0, %66 : vector<1x128xi32>
    %68 = vector.shape_cast %67 : vector<1x128xi1> to vector<1x128xi1>
    %69 = vector.broadcast %68 : vector<1x128xi1> to vector<8x128xi1>
    %c2_i32_24 = arith.constant 2 : i32
    %70 = tpu.dynamic_rotate %59 by %c2_i32_24 dim 1 : vector<8x128xf32>, i32 -> vector<8x128xf32>
    %cst_25 = arith.constant 0.000000e+00 : f32
    %71 = vector.broadcast %cst_25 : f32 to vector<8x128xf32>
    %72 = arith.select %69, %70, %71 : vector<8x128xi1>, vector<8x128xf32>
    %73 = vector.extract_strided_slice %61 {offsets = [0, 0, 0], sizes = [1, 8, 8], strides = [1, 1, 1]} : vector<2x8x8xf32> to vector<1x8x8xf32>
    %74 = vector.shape_cast %73 : vector<1x8x8xf32> to vector<8x8xf32>
    %75 = vector.shape_cast %74 : vector<8x8xf32> to vector<8x8x1xf32>
    %76 = vector.shape_cast %72 : vector<8x128xf32> to vector<1x8x128xf32>
    %77 = vector.broadcast %75 : vector<8x8x1xf32> to vector<8x8x128xf32>
    %78 = vector.broadcast %76 : vector<1x8x128xf32> to vector<8x8x128xf32>
    %79 = arith.mulf %77, %78 : vector<8x8x128xf32>
    %cst_26 = arith.constant dense<0.000000e+00> : vector<8x128xf32>
    %80 = vector.multi_reduction <add>, %79, %cst_26 [1] : vector<8x8x128xf32> to vector<8x128xf32>
    %81 = arith.addf %65, %80 : vector<8x128xf32>
    %82 = vector.extract_strided_slice %61 {offsets = [1, 0, 0], sizes = [1, 8, 8], strides = [1, 1, 1]} : vector<2x8x8xf32> to vector<1x8x8xf32>
    %83 = vector.shape_cast %82 : vector<1x8x8xf32> to vector<8x8xf32>
    %84 = vector.shape_cast %83 : vector<8x8xf32> to vector<8x8x1xf32>
    %85 = vector.shape_cast %59 : vector<8x128xf32> to vector<1x8x128xf32>
    %86 = vector.broadcast %84 : vector<8x8x1xf32> to vector<8x8x128xf32>
    %87 = vector.broadcast %85 : vector<1x8x128xf32> to vector<8x8x128xf32>
    %88 = arith.mulf %86, %87 : vector<8x8x128xf32>
    %cst_27 = arith.constant dense<0.000000e+00> : vector<8x128xf32>
    %89 = vector.multi_reduction <add>, %88, %cst_27 [1] : vector<8x8x128xf32> to vector<8x128xf32>
    %90 = arith.addf %81, %89 : vector<8x128xf32>
    %cst_28 = arith.constant 0.000000e+00 : f32
    %91 = vector.broadcast %cst_28 : f32 to vector<8x128xf32>
    %92 = arith.maximumf %90, %91 : vector<8x128xf32>
    %c2_i32_29 = arith.constant 2 : i32
    %93 = tpu.dynamic_rotate %92 by %c2_i32_29 dim 1 : vector<8x128xf32>, i32 -> vector<8x128xf32>
    %cst_30 = arith.constant 0.000000e+00 : f32
    %94 = vector.broadcast %cst_30 : f32 to vector<8x128xf32>
    %95 = arith.select %69, %93, %94 : vector<8x128xi1>, vector<8x128xf32>
    %96 = vector.extract_strided_slice %61 {offsets = [0, 0, 0], sizes = [1, 8, 8], strides = [1, 1, 1]} : vector<2x8x8xf32> to vector<1x8x8xf32>
    %97 = vector.shape_cast %96 : vector<1x8x8xf32> to vector<8x8xf32>
    %98 = vector.shape_cast %97 : vector<8x8xf32> to vector<8x8x1xf32>
    %99 = vector.shape_cast %95 : vector<8x128xf32> to vector<1x8x128xf32>
    %100 = vector.broadcast %98 : vector<8x8x1xf32> to vector<8x8x128xf32>
    %101 = vector.broadcast %99 : vector<1x8x128xf32> to vector<8x8x128xf32>
    %102 = arith.mulf %100, %101 : vector<8x8x128xf32>
    %cst_31 = arith.constant dense<0.000000e+00> : vector<8x128xf32>
    %103 = vector.multi_reduction <add>, %102, %cst_31 [1] : vector<8x8x128xf32> to vector<8x128xf32>
    %104 = arith.addf %65, %103 : vector<8x128xf32>
    %105 = vector.extract_strided_slice %61 {offsets = [1, 0, 0], sizes = [1, 8, 8], strides = [1, 1, 1]} : vector<2x8x8xf32> to vector<1x8x8xf32>
    %106 = vector.shape_cast %105 : vector<1x8x8xf32> to vector<8x8xf32>
    %107 = vector.shape_cast %106 : vector<8x8xf32> to vector<8x8x1xf32>
    %108 = vector.shape_cast %92 : vector<8x128xf32> to vector<1x8x128xf32>
    %109 = vector.broadcast %107 : vector<8x8x1xf32> to vector<8x8x128xf32>
    %110 = vector.broadcast %108 : vector<1x8x128xf32> to vector<8x8x128xf32>
    %111 = arith.mulf %109, %110 : vector<8x8x128xf32>
    %cst_32 = arith.constant dense<0.000000e+00> : vector<8x128xf32>
    %112 = vector.multi_reduction <add>, %111, %cst_32 [1] : vector<8x8x128xf32> to vector<8x128xf32>
    %113 = arith.addf %104, %112 : vector<8x128xf32>
    %cst_33 = arith.constant 0.000000e+00 : f32
    %114 = vector.broadcast %cst_33 : f32 to vector<8x128xf32>
    %115 = arith.maximumf %113, %114 : vector<8x128xf32>
    %116 = arith.addf %115, %59 : vector<8x128xf32>
    %c0_34 = arith.constant 0 : index
    %c0_35 = arith.constant 0 : index
    %c0_36 = arith.constant 0 : index
    %117 = vector.load %arg4[%c0_34, %c0_35, %c0_36] : memref<1x8x128xf32, #tpu.memory_space<vmem>>, vector<1x8x128xf32>
    %118 = vector.shape_cast %117 : vector<1x8x128xf32> to vector<8x128xf32>
    %119 = vector.shape_cast %116 : vector<8x128xf32> to vector<1x8x128xf32>
    tpu.vector_store %arg4[%c0_34, %c0_35, %c0_36], %119 {strides = array<i32>} : memref<1x8x128xf32, #tpu.memory_space<vmem>>, vector<1x8x128xf32>,
    return
  }
  func.func @transform_0(%arg0: i32) -> (i32, i32, i32) {
    %c0_i32 = arith.constant 0 : i32
    %c0_i32_0 = arith.constant 0 : i32
    %c0_i32_1 = arith.constant 0 : i32
    return %arg0, %c0_i32, %c0_i32_0 : i32, i32, i32
  }
  func.func @transform_1(%arg0: i32) -> (i32, i32, i32, i32) {
    %c0_i32 = arith.constant 0 : i32
    %c0_i32_0 = arith.constant 0 : i32
    %c0_i32_1 = arith.constant 0 : i32
    %c0_i32_2 = arith.constant 0 : i32
    %c0_i32_3 = arith.constant 0 : i32
    return %c0_i32, %c0_i32_0, %c0_i32_1, %c0_i32_2 : i32, i32, i32, i32
  }
  func.func @transform_2(%arg0: i32) -> (i32, i32, i32) {
    %c0_i32 = arith.constant 0 : i32
    %c0_i32_0 = arith.constant 0 : i32
    %c0_i32_1 = arith.constant 0 : i32
    %c0_i32_2 = arith.constant 0 : i32
    return %c0_i32, %c0_i32_0, %c0_i32_1 : i32, i32, i32
  }
  func.func @transform_3(%arg0: i32) -> (i32, i32, i32) {
    %c0_i32 = arith.constant 0 : i32
    %c0_i32_0 = arith.constant 0 : i32
    %c0_i32_1 = arith.constant 0 : i32
    return %arg0, %c0_i32, %c0_i32_0 : i32, i32, i32
  }
}

</mosaic_0001>

<llo_original>
// kernel: tpu_custom_call.1
$region0: #{tpu_custom_call.1}
  #allocation0 [shape = 'u32[]', space=smem, size = 0x4, offset = 0x4, fixed_abs, tag = 'smem constant byte address 0x4 - core index']
  #allocation1 [shape = 'u32[144,128]{1,0:T(1,128)}', space=vmem, size = 0x12000, scoped, tag = 'internal scratch']
  %s0 = inlined_call_operand.vmem [shape: f32[2,8,128], index: 0, kind: input, shape index: {}]
  %s1 = inlined_call_operand.hbm [shape: f32[2,2,8,8], index: 1, kind: input, shape index: {}]
  %s2 = inlined_call_operand.vmem [shape: f32[2,8,1], index: 2, kind: input, shape index: {}]
  %s3 = inlined_call_operand.hbm [shape: f32[2,8,128], index: 3, kind: output, shape index: {}]
  %s4 = sld [smem:[#allocation0]]
  $region49: #{tpu_custom_call.1} parent=0
    _
  %s6 = ssub.s32 1, %s4
  %s7 = scalar_select 0, %s6, %s4
  $region1: #{tpu_custom_call.1} parent=0
    #allocation2 [shape = 'u8[16384]{0}', space=vmem, size = 0x4000, scoped, tag = 'input window, operand 1, single buffered']
    #allocation3 [shape = 's32[2]{0}', space=sflag, size = 0x8, scoped, tag = 'scoped memory for tpu_custom_call.1']
    #allocation4 [shape = 's32[2]{0}', space=sflag, size = 0x8, scoped, tag = 'scoped memory for tpu_custom_call.1']
    #allocation5 [shape = 'u8[8192]{0}', space=vmem, size = 0x2000, scoped, tag = 'output window, operand 0']
    %8 = vsyncpa [#allocation3], 0
    %9 = vsyncpa [#allocation4], 0
    %s10 = scalar_lea.sflag [#allocation4], 1
    %11 = vsyncpa %s10, 0
    loop: start=0, step=1, limit=4
    $region2: #{tpu_custom_call.1} parent=1 // loop_pre_header
      _
    $region3: #{tpu_custom_call.1} parent=1 // loop_header
      %s13 = sphi 0, %s17
      %p14 = scmp.ge.s32.totalorder %s13, 4
      %s23 = sphi 0, %s25
      %s26 = sphi 0, %s23
      %s27 = sphi 0, %s26
      %s43 = sphi 0, %s27
      %s47 = sphi 0, %s47
      %s49 = sphi 0, %s47
      %s50 = sphi 0, %s49
      %s64 = sphi 0, %s50
      %s68 = sphi 0, %s68
      %s70 = sphi 0, %s68
      %s71 = sphi 0, %s70
      %s85 = sphi 0, %s71
      %s91 = sphi 0, %s93
      %s94 = sphi 0, %s91
      %s95 = sphi 0, %s94
      %s111 = sphi 0, %s95
    $region4: #{tpu_custom_call.1} parent=1 // loop_header_branch
      %16 = sbr.rel (%p14) target = $region8
    $region5: #{tpu_custom_call.1} parent=1 // loop_body
      %s18 = ssub.s32 %s13, 1
      %s19 = ssub.s32 %s13, 2
      %s20 = sadd.s32 %s13, 1
      %s21 = ssub.s32 %s13, %s20
      %p22 = scmp.eq.s32.totalorder %s21, 0
      %s24 = sadd.s32 %s23, 1
      %s25 = scalar_select %p22, %s23, %s24
      %p28 = pneg %p22
      %p29 = scmp.eq.s32.totalorder %s13, 1
      %p30 = por %p28, %p29
      %p31 = scmp.ne.s32.totalorder %s23, %s26
      %p32 = scmp.eq.s32.totalorder %s13, 0
      %p33 = por %p31, %p32
      %p34 = scmp.ne.s32.totalorder %s23, %s26
      %p35 = scmp.eq.s32.totalorder %s18, 1
      %p36 = por %p34, %p35
      %p37 = scmp.ne.s32.totalorder %s26, %s27
      %p38 = scmp.eq.s32.totalorder %s18, 0
      %p39 = por %p37, %p38
      %p40 = scmp.ne.s32.totalorder %s26, %s27
      %p41 = scmp.eq.s32.totalorder %s19, 1
      %p42 = por %p40, %p41
      %p44 = scmp.ne.s32.totalorder %s27, %s43
      %p45 = scmp.eq.s32.totalorder %s19, 0
      %p46 = por %p44, %p45
      %s48 = sadd.s32 %s47, 1
      %p51 = scmp.eq.s32.totalorder %s13, 1
      %p52 = scmp.ne.s32.totalorder %s47, %s49
      %p53 = scmp.eq.s32.totalorder %s13, 0
      %p54 = por %p52, %p53
      %p55 = scmp.ne.s32.totalorder %s47, %s49
      %p56 = scmp.eq.s32.totalorder %s18, 1
      %p57 = por %p55, %p56
      %p58 = scmp.ne.s32.totalorder %s49, %s50
      %p59 = scmp.eq.s32.totalorder %s18, 0
      %p60 = por %p58, %p59
      %p61 = scmp.ne.s32.totalorder %s49, %s50
      %p62 = scmp.eq.s32.totalorder %s19, 1
      %p63 = por %p61, %p62
      %p65 = scmp.ne.s32.totalorder %s50, %s64
      %p66 = scmp.eq.s32.totalorder %s19, 0
      %p67 = por %p65, %p66
      %s69 = sadd.s32 %s68, 1
      %p72 = scmp.eq.s32.totalorder %s13, 1
      %p73 = scmp.ne.s32.totalorder %s68, %s70
      %p74 = scmp.eq.s32.totalorder %s13, 0
      %p75 = por %p73, %p74
      %p76 = scmp.ne.s32.totalorder %s68, %s70
      %p77 = scmp.eq.s32.totalorder %s18, 1
      %p78 = por %p76, %p77
      %p79 = scmp.ne.s32.totalorder %s70, %s71
      %p80 = scmp.eq.s32.totalorder %s18, 0
      %p81 = por %p79, %p80
      %p82 = scmp.ne.s32.totalorder %s70, %s71
      %p83 = scmp.eq.s32.totalorder %s19, 1
      %p84 = por %p82, %p83
      %p86 = scmp.ne.s32.totalorder %s71, %s85
      %p87 = scmp.eq.s32.totalorder %s19, 0
      %p88 = por %p86, %p87
      %s89 = ssub.s32 %s13, %s20
      %p90 = scmp.eq.s32.totalorder %s89, 0
      %s92 = sadd.s32 %s91, 1
      %s93 = scalar_select %p90, %s91, %s92
      %p96 = pneg %p90
      %p97 = scmp.eq.s32.totalorder %s13, 1
      %p98 = por %p96, %p97
      %p99 = scmp.ne.s32.totalorder %s91, %s94
      %p100 = scmp.eq.s32.totalorder %s13, 0
      %p101 = por %p99, %p100
      %p102 = scmp.ne.s32.totalorder %s91, %s94
      %p103 = scmp.eq.s32.totalorder %s18, 1
      %p104 = por %p102, %p103
      %p105 = scmp.ne.s32.totalorder %s94, %s95
      %p106 = scmp.eq.s32.totalorder %s18, 0
      %p107 = por %p105, %p106
      %p108 = scmp.ne.s32.totalorder %s94, %s95
      %p109 = scmp.eq.s32.totalorder %s19, 1
      %p110 = por %p108, %p109
      %p112 = scmp.ne.s32.totalorder %s95, %s111
      %p113 = scmp.eq.s32.totalorder %s19, 0
      %p114 = por %p112, %p113
      %p115 = scmp.le.s32.totalorder 1, %s13
      %p116 = scmp.lt.s32.totalorder %s13, 3
      %p117 = pnand %p115, %p116
      %p118 = pneg %p117
      // Predicated region
      $region9: #{tpu_custom_call.1} parent=5 // pred_check
        _
      $region10: #{tpu_custom_call.1} parent=5 // pred_check_branch
        %120 = sbr.rel (%p117) target = $region12
      $region11: #{tpu_custom_call.1} parent=5 // pred_region
        %s121 = ssub.s32 %s13, 1
        // Predicated region
        $region13: #{tpu_custom_call.1} parent=11 // pred_check
          %p122 = pneg %p60
        $region14: #{tpu_custom_call.1} parent=11 // pred_check_branch
          %124 = sbr.rel (%p122) target = $region16
        $region15: #{tpu_custom_call.1} parent=11 // pred_region
          %s126 = ssub.s32 512, 512
          %127 = vsyncadd [#allocation3], %s126
          %s128 = sshll.u32 [#allocation2], 4
          %s129 = int_to_ptr.vmem [resolvable:$true] %s128
          %134 = dma.hbm_to_vmem [thread:$0]  %s1, 512, %s129, [#allocation3], 128, 128, 8
        $region16: #{tpu_custom_call.1} parent=11 // pred_fallthru
          _
        // Predicated region
        $region17: #{tpu_custom_call.1} parent=11 // pred_check
          %p135 = pneg %p81
        $region18: #{tpu_custom_call.1} parent=11 // pred_check_branch
          %137 = sbr.rel (%p135) target = $region20
        $region19: #{tpu_custom_call.1} parent=11 // pred_region
          _
        $region20: #{tpu_custom_call.1} parent=11 // pred_fallthru
          _
      $region12: #{tpu_custom_call.1} parent=5 // pred_fallthru
        _
      %p138 = scmp.lt.s32.totalorder %s13, 2
      // Predicated region
      $region21: #{tpu_custom_call.1} parent=5 // pred_check
        %p139 = pneg %p138
      $region22: #{tpu_custom_call.1} parent=5 // pred_check_branch
        %141 = sbr.rel (%p139) target = $region24
      $region23: #{tpu_custom_call.1} parent=5 // pred_region
        // Predicated region
        $region25: #{tpu_custom_call.1} parent=23 // pred_check
          %p142 = pneg %p33
        $region26: #{tpu_custom_call.1} parent=23 // pred_check_branch
          %144 = sbr.rel (%p142) target = $region28
        $region27: #{tpu_custom_call.1} parent=23 // pred_region
          %p145 = scmp.lt.s32.totalorder %s13, 1
          %s146 = scalar_select %p145, %s13, 1
          %s147 = smul.addr %s146, 8
          %s148 = scalar_lea.vmem %s0, %s147
        $region28: #{tpu_custom_call.1} parent=23 // pred_fallthru
          _
      $region24: #{tpu_custom_call.1} parent=5 // pred_fallthru
        _
      %p149 = scmp.le.s32.totalorder 1, %s13
      %p150 = scmp.lt.s32.totalorder %s13, 3
      %p151 = pnand %p149, %p150
      %p152 = pneg %p151
      // Predicated region
      $region29: #{tpu_custom_call.1} parent=5 // pred_check
        _
      $region30: #{tpu_custom_call.1} parent=5 // pred_check_branch
        %154 = sbr.rel (%p151) target = $region32
      $region31: #{tpu_custom_call.1} parent=5 // pred_region
        %s155 = ssub.s32 %s13, 1
        // Predicated region
        $region33: #{tpu_custom_call.1} parent=31 // pred_check
          %p156 = pneg %p60
        $region34: #{tpu_custom_call.1} parent=31 // pred_check_branch
          %158 = sbr.rel (%p156) target = $region36
        $region35: #{tpu_custom_call.1} parent=31 // pred_region
          %159 = dma.done [#allocation3], 512
        $region36: #{tpu_custom_call.1} parent=31 // pred_fallthru
          _
        %p160 = scmp.lt.s32.totalorder %s18, 1
        %s161 = scalar_select %p160, %s18, 1
        %s162 = smul.addr %s161, 8
        %s163 = scalar_lea.vmem %s0, %s162
        %p164 = pneg %p39
        %p165 = pneg %p36
        %p166 = pneg %p60
        %p167 = pneg %p57
        %p168 = pneg %p81
        %p169 = pneg %p78
        %p170 = pneg %p107
        %p171 = pneg %p104
        %s172 = sand.u32 %s94, 1
        %s173 = scalar_lea.sflag [#allocation4], %s172
        %s174 = sand.u32 %s94, 1
        %s175 = smul.addr %s174, 8
        %s176 = scalar_lea.vmem [#allocation5], %s175
        %p177 = scmp.lt.s32.totalorder %s18, 1
        %s178 = scalar_select %p177, %s18, 1
        %s179 = smul.addr %s178, 8
        %s180 = scalar_lea.vmem %s0, %s179
        %v181 = vlaneseq
        %v182 = vand.u32 %v181, 127
        %v183 = vld [vmem:[%s180] sm:$0xff]
        %v184 = vld [vmem:[#allocation2] sm:$0xff]
        %v185 = vld [vmem:[#allocation2 + $0x8] sm:$0xff]
        %v186 = vld [vmem:[%s2] sm:$0xff]
        %188 = vset.pattern.permute.xlu0 0
        %189 = vperm.xlu0 %188, %v186
        %v190 = vpop.permute.xlu0 %189
        %vm192 = vcmp.ge.s32.totalorder %v182, 1
        %v193 = vsel %vm192, 1, 0
        %vm194 = vcmp.eq.s32.totalorder %v193, 1
        %195 = vrot.lane.b32.xlu0 %v183, 1
        %v196 = vpop.permute.xlu0 %195
        %v197 = vsel %vm194, %v196, 0.0
        %v198 = vlaneseq
        %v199 = vshrl.u32 %v198, 7
        %v200 = vsub.s32 0, %v199
        %v201 = vrot.slane %v184, %v200
        %203 = vbcast.lane.b32.xlu0 %v201, 256
        %v204 = vpop.permute.xlu0 %203
        %v205 = vlaneseq
        %v206 = vshrl.u32 %v205, 7
        %v207 = vsub.s32 1, %v206
        %v208 = vrot.slane %v184, %v207
        %210 = vbcast.lane.b32.xlu0 %v208, 256
        %v211 = vpop.permute.xlu0 %210
        %v212 = vlaneseq
        %v213 = vshrl.u32 %v212, 7
        %v214 = vsub.s32 2, %v213
        %v215 = vrot.slane %v184, %v214
        %217 = vbcast.lane.b32.xlu0 %v215, 256
        %v218 = vpop.permute.xlu0 %217
        %v219 = vlaneseq
        %v220 = vshrl.u32 %v219, 7
        %v221 = vsub.s32 3, %v220
        %v222 = vrot.slane %v184, %v221
        %224 = vbcast.lane.b32.xlu0 %v222, 256
        %v225 = vpop.permute.xlu0 %224
        %v226 = vlaneseq
        %v227 = vshrl.u32 %v226, 7
        %v228 = vsub.s32 4, %v227
        %v229 = vrot.slane %v184, %v228
        %231 = vbcast.lane.b32.xlu0 %v229, 256
        %v232 = vpop.permute.xlu0 %231
        %v233 = vlaneseq
        %v234 = vshrl.u32 %v233, 7
        %v235 = vsub.s32 5, %v234
        %v236 = vrot.slane %v184, %v235
        %238 = vbcast.lane.b32.xlu0 %v236, 256
        %v239 = vpop.permute.xlu0 %238
        %v240 = vlaneseq
        %v241 = vshrl.u32 %v240, 7
        %v242 = vsub.s32 6, %v241
        %v243 = vrot.slane %v184, %v242
        %245 = vbcast.lane.b32.xlu0 %v243, 256
        %v246 = vpop.permute.xlu0 %245
        %v247 = vlaneseq
        %v248 = vshrl.u32 %v247, 7
        %v249 = vsub.s32 7, %v248
        %v250 = vrot.slane %v184, %v249
        %252 = vbcast.lane.b32.xlu0 %v250, 256
        %v253 = vpop.permute.xlu0 %252
        %v254 = vmul.f32 %v204, %v197
        %v255 = vmul.f32 %v211, %v197
        %v256 = vmul.f32 %v218, %v197
        %v257 = vmul.f32 %v225, %v197
        %v258 = vmul.f32 %v232, %v197
        %v259 = vmul.f32 %v239, %v197
        %v260 = vmul.f32 %v246, %v197
        %v261 = vmul.f32 %v253, %v197
        %v262 = vrot.slane %v254, 4
        %v263 = vadd.f32 %v254, %v262
        %v264 = vrot.slane %v263, 2
        %v265 = vadd.f32 %v263, %v264
        %v266 = vrot.slane %v265, 1
        %v267 = vadd.f32 %v265, %v266
        %v268 = vrot.slane %v255, 4
        %v269 = vadd.f32 %v255, %v268
        %v270 = vrot.slane %v269, 2
        %v271 = vadd.f32 %v269, %v270
        %v272 = vrot.slane %v271, 1
        %v273 = vadd.f32 %v271, %v272
        %v274 = vrot.slane %v256, 4
        %v275 = vadd.f32 %v256, %v274
        %v276 = vrot.slane %v275, 2
        %v277 = vadd.f32 %v275, %v276
        %v278 = vrot.slane %v277, 1
        %v279 = vadd.f32 %v277, %v278
        %v280 = vrot.slane %v257, 4
        %v281 = vadd.f32 %v257, %v280
        %v282 = vrot.slane %v281, 2
        %v283 = vadd.f32 %v281, %v282
        %v284 = vrot.slane %v283, 1
        %v285 = vadd.f32 %v283, %v284
        %v286 = vrot.slane %v258, 4
        %v287 = vadd.f32 %v258, %v286
        %v288 = vrot.slane %v287, 2
        %v289 = vadd.f32 %v287, %v288
        %v290 = vrot.slane %v289, 1
        %v291 = vadd.f32 %v289, %v290
        %v292 = vrot.slane %v259, 4
        %v293 = vadd.f32 %v259, %v292
        %v294 = vrot.slane %v293, 2
        %v295 = vadd.f32 %v293, %v294
        %v296 = vrot.slane %v295, 1
        %v297 = vadd.f32 %v295, %v296
        %v298 = vrot.slane %v260, 4
        %v299 = vadd.f32 %v260, %v298
        %v300 = vrot.slane %v299, 2
        %v301 = vadd.f32 %v299, %v300
        %v302 = vrot.slane %v301, 1
        %v303 = vadd.f32 %v301, %v302
        %v304 = vrot.slane %v261, 4
        %v305 = vadd.f32 %v261, %v304
        %v306 = vrot.slane %v305, 2
        %v307 = vadd.f32 %v305, %v306
        %v308 = vrot.slane %v307, 1
        %v309 = vadd.f32 %v307, %v308
        %vm318 = vcmask 1041409
        %v319 = vsel %vm318, %v273, %v267
        %vm320 = vcmask 1042434
        %v321 = vsel %vm320, %v279, %v319
        %vm322 = vcmask 1043459
        %v323 = vsel %vm322, %v285, %v321
        %vm324 = vcmask 1044484
        %v325 = vsel %vm324, %v291, %v323
        %vm326 = vcmask 1045509
        %v327 = vsel %vm326, %v297, %v325
        %vm328 = vcmask 1046534
        %v329 = vsel %vm328, %v303, %v327
        %vm330 = vcmask 1047559
        %v331 = vsel %vm330, %v309, %v329
        %v333 = vadd.f32 %v190, %v331
        %v334 = vlaneseq
        %v335 = vshrl.u32 %v334, 7
        %v336 = vsub.s32 0, %v335
        %v337 = vrot.slane %v185, %v336
        %339 = vbcast.lane.b32.xlu0 %v337, 256
        %v340 = vpop.permute.xlu0 %339
        %v341 = vlaneseq
        %v342 = vshrl.u32 %v341, 7
        %v343 = vsub.s32 1, %v342
        %v344 = vrot.slane %v185, %v343
        %346 = vbcast.lane.b32.xlu0 %v344, 256
        %v347 = vpop.permute.xlu0 %346
        %v348 = vlaneseq
        %v349 = vshrl.u32 %v348, 7
        %v350 = vsub.s32 2, %v349
        %v351 = vrot.slane %v185, %v350
        %353 = vbcast.lane.b32.xlu0 %v351, 256
        %v354 = vpop.permute.xlu0 %353
        %v355 = vlaneseq
        %v356 = vshrl.u32 %v355, 7
        %v357 = vsub.s32 3, %v356
        %v358 = vrot.slane %v185, %v357
        %360 = vbcast.lane.b32.xlu0 %v358, 256
        %v361 = vpop.permute.xlu0 %360
        %v362 = vlaneseq
        %v363 = vshrl.u32 %v362, 7
        %v364 = vsub.s32 4, %v363
        %v365 = vrot.slane %v185, %v364
        %367 = vbcast.lane.b32.xlu0 %v365, 256
        %v368 = vpop.permute.xlu0 %367
        %v369 = vlaneseq
        %v370 = vshrl.u32 %v369, 7
        %v371 = vsub.s32 5, %v370
        %v372 = vrot.slane %v185, %v371
        %374 = vbcast.lane.b32.xlu0 %v372, 256
        %v375 = vpop.permute.xlu0 %374
        %v376 = vlaneseq
        %v377 = vshrl.u32 %v376, 7
        %v378 = vsub.s32 6, %v377
        %v379 = vrot.slane %v185, %v378
        %381 = vbcast.lane.b32.xlu0 %v379, 256
        %v382 = vpop.permute.xlu0 %381
        %v383 = vlaneseq
        %v384 = vshrl.u32 %v383, 7
        %v385 = vsub.s32 7, %v384
        %v386 = vrot.slane %v185, %v385
        %388 = vbcast.lane.b32.xlu0 %v386, 256
        %v389 = vpop.permute.xlu0 %388
        %v390 = vmul.f32 %v340, %v183
        %v391 = vmul.f32 %v347, %v183
        %v392 = vmul.f32 %v354, %v183
        %v393 = vmul.f32 %v361, %v183
        %v394 = vmul.f32 %v368, %v183
        %v395 = vmul.f32 %v375, %v183
        %v396 = vmul.f32 %v382, %v183
        %v397 = vmul.f32 %v389, %v183
        %v398 = vrot.slane %v390, 4
        %v399 = vadd.f32 %v390, %v398
        %v400 = vrot.slane %v399, 2
        %v401 = vadd.f32 %v399, %v400
        %v402 = vrot.slane %v401, 1
        %v403 = vadd.f32 %v401, %v402
        %v404 = vrot.slane %v391, 4
        %v405 = vadd.f32 %v391, %v404
        %v406 = vrot.slane %v405, 2
        %v407 = vadd.f32 %v405, %v406
        %v408 = vrot.slane %v407, 1
        %v409 = vadd.f32 %v407, %v408
        %v410 = vrot.slane %v392, 4
        %v411 = vadd.f32 %v392, %v410
        %v412 = vrot.slane %v411, 2
        %v413 = vadd.f32 %v411, %v412
        %v414 = vrot.slane %v413, 1
        %v415 = vadd.f32 %v413, %v414
        %v416 = vrot.slane %v393, 4
        %v417 = vadd.f32 %v393, %v416
        %v418 = vrot.slane %v417, 2
        %v419 = vadd.f32 %v417, %v418
        %v420 = vrot.slane %v419, 1
        %v421 = vadd.f32 %v419, %v420
        %v422 = vrot.slane %v394, 4
        %v423 = vadd.f32 %v394, %v422
        %v424 = vrot.slane %v423, 2
        %v425 = vadd.f32 %v423, %v424
        %v426 = vrot.slane %v425, 1
        %v427 = vadd.f32 %v425, %v426
        %v428 = vrot.slane %v395, 4
        %v429 = vadd.f32 %v395, %v428
        %v430 = vrot.slane %v429, 2
        %v431 = vadd.f32 %v429, %v430
        %v432 = vrot.slane %v431, 1
        %v433 = vadd.f32 %v431, %v432
        %v434 = vrot.slane %v396, 4
        %v435 = vadd.f32 %v396, %v434
        %v436 = vrot.slane %v435, 2
        %v437 = vadd.f32 %v435, %v436
        %v438 = vrot.slane %v437, 1
        %v439 = vadd.f32 %v437, %v438
        %v440 = vrot.slane %v397, 4
        %v441 = vadd.f32 %v397, %v440
        %v442 = vrot.slane %v441, 2
        %v443 = vadd.f32 %v441, %v442
        %v444 = vrot.slane %v443, 1
        %v445 = vadd.f32 %v443, %v444
        %v454 = vsel %vm318, %v409, %v403
        %v455 = vsel %vm320, %v415, %v454
        %v456 = vsel %vm322, %v421, %v455
        %v457 = vsel %vm324, %v427, %v456
        %v458 = vsel %vm326, %v433, %v457
        %v459 = vsel %vm328, %v439, %v458
        %v460 = vsel %vm330, %v445, %v459
        %v462 = vadd.f32 %v333, %v460
        %v463 = vmax.f32 %v462, 0.0
        %464 = vrot.lane.b32.xlu0 %v463, 1
        %v465 = vpop.permute.xlu0 %464
        %v466 = vsel %vm194, %v465, 0.0
        %v467 = vmul.f32 %v204, %v466
        %v468 = vmul.f32 %v211, %v466
        %v469 = vmul.f32 %v218, %v466
        %v470 = vmul.f32 %v225, %v466
        %v471 = vmul.f32 %v232, %v466
        %v472 = vmul.f32 %v239, %v466
        %v473 = vmul.f32 %v246, %v466
        %v474 = vmul.f32 %v253, %v466
        %v475 = vrot.slane %v467, 4
        %v476 = vadd.f32 %v467, %v475
        %v477 = vrot.slane %v476, 2
        %v478 = vadd.f32 %v476, %v477
        %v479 = vrot.slane %v478, 1
        %v480 = vadd.f32 %v478, %v479
        %v481 = vrot.slane %v468, 4
        %v482 = vadd.f32 %v468, %v481
        %v483 = vrot.slane %v482, 2
        %v484 = vadd.f32 %v482, %v483
        %v485 = vrot.slane %v484, 1
        %v486 = vadd.f32 %v484, %v485
        %v487 = vrot.slane %v469, 4
        %v488 = vadd.f32 %v469, %v487
        %v489 = vrot.slane %v488, 2
        %v490 = vadd.f32 %v488, %v489
        %v491 = vrot.slane %v490, 1
        %v492 = vadd.f32 %v490, %v491
        %v493 = vrot.slane %v470, 4
        %v494 = vadd.f32 %v470, %v493
        %v495 = vrot.slane %v494, 2
        %v496 = vadd.f32 %v494, %v495
        %v497 = vrot.slane %v496, 1
        %v498 = vadd.f32 %v496, %v497
        %v499 = vrot.slane %v471, 4
        %v500 = vadd.f32 %v471, %v499
        %v501 = vrot.slane %v500, 2
        %v502 = vadd.f32 %v500, %v501
        %v503 = vrot.slane %v502, 1
        %v504 = vadd.f32 %v502, %v503
        %v505 = vrot.slane %v472, 4
        %v506 = vadd.f32 %v472, %v505
        %v507 = vrot.slane %v506, 2
        %v508 = vadd.f32 %v506, %v507
        %v509 = vrot.slane %v508, 1
        %v510 = vadd.f32 %v508, %v509
        %v511 = vrot.slane %v473, 4
        %v512 = vadd.f32 %v473, %v511
        %v513 = vrot.slane %v512, 2
        %v514 = vadd.f32 %v512, %v513
        %v515 = vrot.slane %v514, 1
        %v516 = vadd.f32 %v514, %v515
        %v517 = vrot.slane %v474, 4
        %v518 = vadd.f32 %v474, %v517
        %v519 = vrot.slane %v518, 2
        %v520 = vadd.f32 %v518, %v519
        %v521 = vrot.slane %v520, 1
        %v522 = vadd.f32 %v520, %v521
        %v531 = vsel %vm318, %v486, %v480
        %v532 = vsel %vm320, %v492, %v531
        %v533 = vsel %vm322, %v498, %v532
        %v534 = vsel %vm324, %v504, %v533
        %v535 = vsel %vm326, %v510, %v534
        %v536 = vsel %vm328, %v516, %v535
        %v537 = vsel %vm330, %v522, %v536
        %v539 = vadd.f32 %v190, %v537
        %v540 = vmul.f32 %v340, %v463
        %v541 = vmul.f32 %v347, %v463
        %v542 = vmul.f32 %v354, %v463
        %v543 = vmul.f32 %v361, %v463
        %v544 = vmul.f32 %v368, %v463
        %v545 = vmul.f32 %v375, %v463
        %v546 = vmul.f32 %v382, %v463
        %v547 = vmul.f32 %v389, %v463
        %v548 = vrot.slane %v540, 4
        %v549 = vadd.f32 %v540, %v548
        %v550 = vrot.slane %v549, 2
        %v551 = vadd.f32 %v549, %v550
        %v552 = vrot.slane %v551, 1
        %v553 = vadd.f32 %v551, %v552
        %v554 = vrot.slane %v541, 4
        %v555 = vadd.f32 %v541, %v554
        %v556 = vrot.slane %v555, 2
        %v557 = vadd.f32 %v555, %v556
        %v558 = vrot.slane %v557, 1
        %v559 = vadd.f32 %v557, %v558
        %v560 = vrot.slane %v542, 4
        %v561 = vadd.f32 %v542, %v560
        %v562 = vrot.slane %v561, 2
        %v563 = vadd.f32 %v561, %v562
        %v564 = vrot.slane %v563, 1
        %v565 = vadd.f32 %v563, %v564
        %v566 = vrot.slane %v543, 4
        %v567 = vadd.f32 %v543, %v566
        %v568 = vrot.slane %v567, 2
        %v569 = vadd.f32 %v567, %v568
        %v570 = vrot.slane %v569, 1
        %v571 = vadd.f32 %v569, %v570
        %v572 = vrot.slane %v544, 4
        %v573 = vadd.f32 %v544, %v572
        %v574 = vrot.slane %v573, 2
        %v575 = vadd.f32 %v573, %v574
        %v576 = vrot.slane %v575, 1
        %v577 = vadd.f32 %v575, %v576
        %v578 = vrot.slane %v545, 4
        %v579 = vadd.f32 %v545, %v578
        %v580 = vrot.slane %v579, 2
        %v581 = vadd.f32 %v579, %v580
        %v582 = vrot.slane %v581, 1
        %v583 = vadd.f32 %v581, %v582
        %v584 = vrot.slane %v546, 4
        %v585 = vadd.f32 %v546, %v584
        %v586 = vrot.slane %v585, 2
        %v587 = vadd.f32 %v585, %v586
        %v588 = vrot.slane %v587, 1
        %v589 = vadd.f32 %v587, %v588
        %v590 = vrot.slane %v547, 4
        %v591 = vadd.f32 %v547, %v590
        %v592 = vrot.slane %v591, 2
        %v593 = vadd.f32 %v591, %v592
        %v594 = vrot.slane %v593, 1
        %v595 = vadd.f32 %v593, %v594
        %v604 = vsel %vm318, %v559, %v553
        %v605 = vsel %vm320, %v565, %v604
        %v606 = vsel %vm322, %v571, %v605
        %v607 = vsel %vm324, %v577, %v606
        %v608 = vsel %vm326, %v583, %v607
        %v609 = vsel %vm328, %v589, %v608
        %v610 = vsel %vm330, %v595, %v609
        %v612 = vadd.f32 %v539, %v610
        %v613 = vmax.f32 %v612, 0.0
        %v614 = vadd.f32 %v613, %v183
        %s615 = scalar_lea.vmem [#allocation2], 16
        %v616 = vld [vmem:[%s615] sm:$0xff]
        %v617 = vld [vmem:[%s615 + $0x8] sm:$0xff]
        %s618 = scalar_lea.vmem %s2, 8
        %v619 = vld [vmem:[%s618] sm:$0xff]
        %621 = vset.pattern.permute.xlu0 0
        %622 = vperm.xlu0 %621, %v619
        %v623 = vpop.permute.xlu0 %622
        %vm625 = vcmp.ge.s32.totalorder %v182, 2
        %v626 = vsel %vm625, 1, 0
        %vm627 = vcmp.eq.s32.totalorder %v626, 1
        %628 = vrot.lane.b32.xlu0 %v614, 2
        %v629 = vpop.permute.xlu0 %628
        %v630 = vsel %vm627, %v629, 0.0
        %v631 = vlaneseq
        %v632 = vshrl.u32 %v631, 7
        %v633 = vsub.s32 0, %v632
        %v634 = vrot.slane %v616, %v633
        %636 = vbcast.lane.b32.xlu0 %v634, 256
        %v637 = vpop.permute.xlu0 %636
        %v638 = vlaneseq
        %v639 = vshrl.u32 %v638, 7
        %v640 = vsub.s32 1, %v639
        %v641 = vrot.slane %v616, %v640
        %643 = vbcast.lane.b32.xlu0 %v641, 256
        %v644 = vpop.permute.xlu0 %643
        %v645 = vlaneseq
        %v646 = vshrl.u32 %v645, 7
        %v647 = vsub.s32 2, %v646
        %v648 = vrot.slane %v616, %v647
        %650 = vbcast.lane.b32.xlu0 %v648, 256
        %v651 = vpop.permute.xlu0 %650
        %v652 = vlaneseq
        %v653 = vshrl.u32 %v652, 7
        %v654 = vsub.s32 3, %v653
        %v655 = vrot.slane %v616, %v654
        %657 = vbcast.lane.b32.xlu0 %v655, 256
        %v658 = vpop.permute.xlu0 %657
        %v659 = vlaneseq
        %v660 = vshrl.u32 %v659, 7
        %v661 = vsub.s32 4, %v660
        %v662 = vrot.slane %v616, %v661
        %664 = vbcast.lane.b32.xlu0 %v662, 256
        %v665 = vpop.permute.xlu0 %664
        %v666 = vlaneseq
        %v667 = vshrl.u32 %v666, 7
        %v668 = vsub.s32 5, %v667
        %v669 = vrot.slane %v616, %v668
        %671 = vbcast.lane.b32.xlu0 %v669, 256
        %v672 = vpop.permute.xlu0 %671
        %v673 = vlaneseq
        %v674 = vshrl.u32 %v673, 7
        %v675 = vsub.s32 6, %v674
        %v676 = vrot.slane %v616, %v675
        %678 = vbcast.lane.b32.xlu0 %v676, 256
        %v679 = vpop.permute.xlu0 %678
        %v680 = vlaneseq
        %v681 = vshrl.u32 %v680, 7
        %v682 = vsub.s32 7, %v681
        %v683 = vrot.slane %v616, %v682
        %685 = vbcast.lane.b32.xlu0 %v683, 256
        %v686 = vpop.permute.xlu0 %685
        %v687 = vmul.f32 %v637, %v630
        %v688 = vmul.f32 %v644, %v630
        %v689 = vmul.f32 %v651, %v630
        %v690 = vmul.f32 %v658, %v630
        %v691 = vmul.f32 %v665, %v630
        %v692 = vmul.f32 %v672, %v630
        %v693 = vmul.f32 %v679, %v630
        %v694 = vmul.f32 %v686, %v630
        %v695 = vrot.slane %v687, 4
        %v696 = vadd.f32 %v687, %v695
        %v697 = vrot.slane %v696, 2
        %v698 = vadd.f32 %v696, %v697
        %v699 = vrot.slane %v698, 1
        %v700 = vadd.f32 %v698, %v699
        %v701 = vrot.slane %v688, 4
        %v702 = vadd.f32 %v688, %v701
        %v703 = vrot.slane %v702, 2
        %v704 = vadd.f32 %v702, %v703
        %v705 = vrot.slane %v704, 1
        %v706 = vadd.f32 %v704, %v705
        %v707 = vrot.slane %v689, 4
        %v708 = vadd.f32 %v689, %v707
        %v709 = vrot.slane %v708, 2
        %v710 = vadd.f32 %v708, %v709
        %v711 = vrot.slane %v710, 1
        %v712 = vadd.f32 %v710, %v711
        %v713 = vrot.slane %v690, 4
        %v714 = vadd.f32 %v690, %v713
        %v715 = vrot.slane %v714, 2
        %v716 = vadd.f32 %v714, %v715
        %v717 = vrot.slane %v716, 1
        %v718 = vadd.f32 %v716, %v717
        %v719 = vrot.slane %v691, 4
        %v720 = vadd.f32 %v691, %v719
        %v721 = vrot.slane %v720, 2
        %v722 = vadd.f32 %v720, %v721
        %v723 = vrot.slane %v722, 1
        %v724 = vadd.f32 %v722, %v723
        %v725 = vrot.slane %v692, 4
        %v726 = vadd.f32 %v692, %v725
        %v727 = vrot.slane %v726, 2
        %v728 = vadd.f32 %v726, %v727
        %v729 = vrot.slane %v728, 1
        %v730 = vadd.f32 %v728, %v729
        %v731 = vrot.slane %v693, 4
        %v732 = vadd.f32 %v693, %v731
        %v733 = vrot.slane %v732, 2
        %v734 = vadd.f32 %v732, %v733
        %v735 = vrot.slane %v734, 1
        %v736 = vadd.f32 %v734, %v735
        %v737 = vrot.slane %v694, 4
        %v738 = vadd.f32 %v694, %v737
        %v739 = vrot.slane %v738, 2
        %v740 = vadd.f32 %v738, %v739
        %v741 = vrot.slane %v740, 1
        %v742 = vadd.f32 %v740, %v741
        %v751 = vsel %vm318, %v706, %v700
        %v752 = vsel %vm320, %v712, %v751
        %v753 = vsel %vm322, %v718, %v752
        %v754 = vsel %vm324, %v724, %v753
        %v755 = vsel %vm326, %v730, %v754
        %v756 = vsel %vm328, %v736, %v755
        %v757 = vsel %vm330, %v742, %v756
        %v759 = vadd.f32 %v623, %v757
        %v760 = vlaneseq
        %v761 = vshrl.u32 %v760, 7
        %v762 = vsub.s32 0, %v761
        %v763 = vrot.slane %v617, %v762
        %765 = vbcast.lane.b32.xlu0 %v763, 256
        %v766 = vpop.permute.xlu0 %765
        %v767 = vlaneseq
        %v768 = vshrl.u32 %v767, 7
        %v769 = vsub.s32 1, %v768
        %v770 = vrot.slane %v617, %v769
        %772 = vbcast.lane.b32.xlu0 %v770, 256
        %v773 = vpop.permute.xlu0 %772
        %v774 = vlaneseq
        %v775 = vshrl.u32 %v774, 7
        %v776 = vsub.s32 2, %v775
        %v777 = vrot.slane %v617, %v776
        %779 = vbcast.lane.b32.xlu0 %v777, 256
        %v780 = vpop.permute.xlu0 %779
        %v781 = vlaneseq
        %v782 = vshrl.u32 %v781, 7
        %v783 = vsub.s32 3, %v782
        %v784 = vrot.slane %v617, %v783
        %786 = vbcast.lane.b32.xlu0 %v784, 256
        %v787 = vpop.permute.xlu0 %786
        %v788 = vlaneseq
        %v789 = vshrl.u32 %v788, 7
        %v790 = vsub.s32 4, %v789
        %v791 = vrot.slane %v617, %v790
        %793 = vbcast.lane.b32.xlu0 %v791, 256
        %v794 = vpop.permute.xlu0 %793
        %v795 = vlaneseq
        %v796 = vshrl.u32 %v795, 7
        %v797 = vsub.s32 5, %v796
        %v798 = vrot.slane %v617, %v797
        %800 = vbcast.lane.b32.xlu0 %v798, 256
        %v801 = vpop.permute.xlu0 %800
        %v802 = vlaneseq
        %v803 = vshrl.u32 %v802, 7
        %v804 = vsub.s32 6, %v803
        %v805 = vrot.slane %v617, %v804
        %807 = vbcast.lane.b32.xlu0 %v805, 256
        %v808 = vpop.permute.xlu0 %807
        %v809 = vlaneseq
        %v810 = vshrl.u32 %v809, 7
        %v811 = vsub.s32 7, %v810
        %v812 = vrot.slane %v617, %v811
        %814 = vbcast.lane.b32.xlu0 %v812, 256
        %v815 = vpop.permute.xlu0 %814
        %v816 = vmul.f32 %v766, %v614
        %v817 = vmul.f32 %v773, %v614
        %v818 = vmul.f32 %v780, %v614
        %v819 = vmul.f32 %v787, %v614
        %v820 = vmul.f32 %v794, %v614
        %v821 = vmul.f32 %v801, %v614
        %v822 = vmul.f32 %v808, %v614
        %v823 = vmul.f32 %v815, %v614
        %v824 = vrot.slane %v816, 4
        %v825 = vadd.f32 %v816, %v824
        %v826 = vrot.slane %v825, 2
        %v827 = vadd.f32 %v825, %v826
        %v828 = vrot.slane %v827, 1
        %v829 = vadd.f32 %v827, %v828
        %v830 = vrot.slane %v817, 4
        %v831 = vadd.f32 %v817, %v830
        %v832 = vrot.slane %v831, 2
        %v833 = vadd.f32 %v831, %v832
        %v834 = vrot.slane %v833, 1
        %v835 = vadd.f32 %v833, %v834
        %v836 = vrot.slane %v818, 4
        %v837 = vadd.f32 %v818, %v836
        %v838 = vrot.slane %v837, 2
        %v839 = vadd.f32 %v837, %v838
        %v840 = vrot.slane %v839, 1
        %v841 = vadd.f32 %v839, %v840
        %v842 = vrot.slane %v819, 4
        %v843 = vadd.f32 %v819, %v842
        %v844 = vrot.slane %v843, 2
        %v845 = vadd.f32 %v843, %v844
        %v846 = vrot.slane %v845, 1
        %v847 = vadd.f32 %v845, %v846
        %v848 = vrot.slane %v820, 4
        %v849 = vadd.f32 %v820, %v848
        %v850 = vrot.slane %v849, 2
        %v851 = vadd.f32 %v849, %v850
        %v852 = vrot.slane %v851, 1
        %v853 = vadd.f32 %v851, %v852
        %v854 = vrot.slane %v821, 4
        %v855 = vadd.f32 %v821, %v854
        %v856 = vrot.slane %v855, 2
        %v857 = vadd.f32 %v855, %v856
        %v858 = vrot.slane %v857, 1
        %v859 = vadd.f32 %v857, %v858
        %v860 = vrot.slane %v822, 4
        %v861 = vadd.f32 %v822, %v860
        %v862 = vrot.slane %v861, 2
        %v863 = vadd.f32 %v861, %v862
        %v864 = vrot.slane %v863, 1
        %v865 = vadd.f32 %v863, %v864
        %v866 = vrot.slane %v823, 4
        %v867 = vadd.f32 %v823, %v866
        %v868 = vrot.slane %v867, 2
        %v869 = vadd.f32 %v867, %v868
        %v870 = vrot.slane %v869, 1
        %v871 = vadd.f32 %v869, %v870
        %v880 = vsel %vm318, %v835, %v829
        %v881 = vsel %vm320, %v841, %v880
        %v882 = vsel %vm322, %v847, %v881
        %v883 = vsel %vm324, %v853, %v882
        %v884 = vsel %vm326, %v859, %v883
        %v885 = vsel %vm328, %v865, %v884
        %v886 = vsel %vm330, %v871, %v885
        %v888 = vadd.f32 %v759, %v886
        %v889 = vmax.f32 %v888, 0.0
        %890 = vrot.lane.b32.xlu0 %v889, 2
        %v891 = vpop.permute.xlu0 %890
        %v892 = vsel %vm627, %v891, 0.0
        %v893 = vmul.f32 %v637, %v892
        %v894 = vmul.f32 %v644, %v892
        %v895 = vmul.f32 %v651, %v892
        %v896 = vmul.f32 %v658, %v892
        %v897 = vmul.f32 %v665, %v892
        %v898 = vmul.f32 %v672, %v892
        %v899 = vmul.f32 %v679, %v892
        %v900 = vmul.f32 %v686, %v892
        %v901 = vrot.slane %v893, 4
        %v902 = vadd.f32 %v893, %v901
        %v903 = vrot.slane %v902, 2
        %v904 = vadd.f32 %v902, %v903
        %v905 = vrot.slane %v904, 1
        %v906 = vadd.f32 %v904, %v905
        %v907 = vrot.slane %v894, 4
        %v908 = vadd.f32 %v894, %v907
        %v909 = vrot.slane %v908, 2
        %v910 = vadd.f32 %v908, %v909
        %v911 = vrot.slane %v910, 1
        %v912 = vadd.f32 %v910, %v911
        %v913 = vrot.slane %v895, 4
        %v914 = vadd.f32 %v895, %v913
        %v915 = vrot.slane %v914, 2
        %v916 = vadd.f32 %v914, %v915
        %v917 = vrot.slane %v916, 1
        %v918 = vadd.f32 %v916, %v917
        %v919 = vrot.slane %v896, 4
        %v920 = vadd.f32 %v896, %v919
        %v921 = vrot.slane %v920, 2
        %v922 = vadd.f32 %v920, %v921
        %v923 = vrot.slane %v922, 1
        %v924 = vadd.f32 %v922, %v923
        %v925 = vrot.slane %v897, 4
        %v926 = vadd.f32 %v897, %v925
        %v927 = vrot.slane %v926, 2
        %v928 = vadd.f32 %v926, %v927
        %v929 = vrot.slane %v928, 1
        %v930 = vadd.f32 %v928, %v929
        %v931 = vrot.slane %v898, 4
        %v932 = vadd.f32 %v898, %v931
        %v933 = vrot.slane %v932, 2
        %v934 = vadd.f32 %v932, %v933
        %v935 = vrot.slane %v934, 1
        %v936 = vadd.f32 %v934, %v935
        %v937 = vrot.slane %v899, 4
        %v938 = vadd.f32 %v899, %v937
        %v939 = vrot.slane %v938, 2
        %v940 = vadd.f32 %v938, %v939
        %v941 = vrot.slane %v940, 1
        %v942 = vadd.f32 %v940, %v941
        %v943 = vrot.slane %v900, 4
        %v944 = vadd.f32 %v900, %v943
        %v945 = vrot.slane %v944, 2
        %v946 = vadd.f32 %v944, %v945
        %v947 = vrot.slane %v946, 1
        %v948 = vadd.f32 %v946, %v947
        %v957 = vsel %vm318, %v912, %v906
        %v958 = vsel %vm320, %v918, %v957
        %v959 = vsel %vm322, %v924, %v958
        %v960 = vsel %vm324, %v930, %v959
        %v961 = vsel %vm326, %v936, %v960
        %v962 = vsel %vm328, %v942, %v961
        %v963 = vsel %vm330, %v948, %v962
        %v965 = vadd.f32 %v623, %v963
        %v966 = vmul.f32 %v766, %v889
        %v967 = vmul.f32 %v773, %v889
        %v968 = vmul.f32 %v780, %v889
        %v969 = vmul.f32 %v787, %v889
        %v970 = vmul.f32 %v794, %v889
        %v971 = vmul.f32 %v801, %v889
        %v972 = vmul.f32 %v808, %v889
        %v973 = vmul.f32 %v815, %v889
        %v974 = vrot.slane %v966, 4
        %v975 = vadd.f32 %v966, %v974
        %v976 = vrot.slane %v975, 2
        %v977 = vadd.f32 %v975, %v976
        %v978 = vrot.slane %v977, 1
        %v979 = vadd.f32 %v977, %v978
        %v980 = vrot.slane %v967, 4
        %v981 = vadd.f32 %v967, %v980
        %v982 = vrot.slane %v981, 2
        %v983 = vadd.f32 %v981, %v982
        %v984 = vrot.slane %v983, 1
        %v985 = vadd.f32 %v983, %v984
        %v986 = vrot.slane %v968, 4
        %v987 = vadd.f32 %v968, %v986
        %v988 = vrot.slane %v987, 2
        %v989 = vadd.f32 %v987, %v988
        %v990 = vrot.slane %v989, 1
        %v991 = vadd.f32 %v989, %v990
        %v992 = vrot.slane %v969, 4
        %v993 = vadd.f32 %v969, %v992
        %v994 = vrot.slane %v993, 2
        %v995 = vadd.f32 %v993, %v994
        %v996 = vrot.slane %v995, 1
        %v997 = vadd.f32 %v995, %v996
        %v998 = vrot.slane %v970, 4
        %v999 = vadd.f32 %v970, %v998
        %v1000 = vrot.slane %v999, 2
        %v1001 = vadd.f32 %v999, %v1000
        %v1002 = vrot.slane %v1001, 1
        %v1003 = vadd.f32 %v1001, %v1002
        %v1004 = vrot.slane %v971, 4
        %v1005 = vadd.f32 %v971, %v1004
        %v1006 = vrot.slane %v1005, 2
        %v1007 = vadd.f32 %v1005, %v1006
        %v1008 = vrot.slane %v1007, 1
        %v1009 = vadd.f32 %v1007, %v1008
        %v1010 = vrot.slane %v972, 4
        %v1011 = vadd.f32 %v972, %v1010
        %v1012 = vrot.slane %v1011, 2
        %v1013 = vadd.f32 %v1011, %v1012
        %v1014 = vrot.slane %v1013, 1
        %v1015 = vadd.f32 %v1013, %v1014
        %v1016 = vrot.slane %v973, 4
        %v1017 = vadd.f32 %v973, %v1016
        %v1018 = vrot.slane %v1017, 2
        %v1019 = vadd.f32 %v1017, %v1018
        %v1020 = vrot.slane %v1019, 1
        %v1021 = vadd.f32 %v1019, %v1020
        %v1030 = vsel %vm318, %v985, %v979
        %v1031 = vsel %vm320, %v991, %v1030
        %v1032 = vsel %vm322, %v997, %v1031
        %v1033 = vsel %vm324, %v1003, %v1032
        %v1034 = vsel %vm326, %v1009, %v1033
        %v1035 = vsel %vm328, %v1015, %v1034
        %v1036 = vsel %vm330, %v1021, %v1035
        %v1038 = vadd.f32 %v965, %v1036
        %v1039 = vmax.f32 %v1038, 0.0
        %v1040 = vadd.f32 %v1039, %v614
        %1041 = vst [vmem:[%s176] sm:$0xff] %v1040
        %s1042 = sand.u32 %s94, 1
        %s1043 = scalar_lea.sflag [#allocation4], %s1042
        %s1044 = sand.u32 %s94, 1
        %s1045 = smul.addr %s1044, 8
        %s1046 = scalar_lea.vmem [#allocation5], %s1045
        // Predicated region
        $region37: #{tpu_custom_call.1} parent=31 // pred_check
          %p1047 = pneg %p104
        $region38: #{tpu_custom_call.1} parent=31 // pred_check_branch
          %1049 = sbr.rel (%p1047) target = $region40
        $region39: #{tpu_custom_call.1} parent=31 // pred_region
          %s1051 = ssub.s32 128, 128
          %1052 = vsyncadd %s1043, %s1051
          %s1053 = smul.addr %s18, 128
          %s1054 = scalar_lea.hbm %s3, %s1053
          %s1056 = sshll.u32 %s1046, 4
          %s1057 = int_to_ptr.vmem [resolvable:$true] %s1056
          %1059 = dma.vmem_to_hbm [thread:$0]  %s1057, 128, %s1054, %s1043
        $region40: #{tpu_custom_call.1} parent=31 // pred_fallthru
          _
      $region32: #{tpu_custom_call.1} parent=5 // pred_fallthru
        _
      %p1060 = scmp.le.s32.totalorder 2, %s13
      // Predicated region
      $region41: #{tpu_custom_call.1} parent=5 // pred_check
        %p1061 = pneg %p1060
      $region42: #{tpu_custom_call.1} parent=5 // pred_check_branch
        %1063 = sbr.rel (%p1061) target = $region44
      $region43: #{tpu_custom_call.1} parent=5 // pred_region
        %s1064 = ssub.s32 %s13, 2
        // Predicated region
        $region45: #{tpu_custom_call.1} parent=43 // pred_check
          %p1065 = pneg %p110
        $region46: #{tpu_custom_call.1} parent=43 // pred_check_branch
          %1067 = sbr.rel (%p1065) target = $region48
        $region47: #{tpu_custom_call.1} parent=43 // pred_region
          %s1068 = sand.u32 %s95, 1
          %s1069 = scalar_lea.sflag [#allocation4], %s1068
          %s1070 = sand.u32 %s95, 1
          %s1071 = smul.addr %s1070, 8
          %s1072 = scalar_lea.vmem [#allocation5], %s1071
          %1073 = dma.done %s1069, 128
        $region48: #{tpu_custom_call.1} parent=43 // pred_fallthru
          _
      $region44: #{tpu_custom_call.1} parent=5 // pred_fallthru
        _
    $region6: #{tpu_custom_call.1} parent=1 // loop_footer
      %s17 = sadd.s32 1, %s13
    $region7: #{tpu_custom_call.1} parent=1 // loop_footer_branch
      %12 = sbr.rel target = $region3
    $region8: #{tpu_custom_call.1} parent=1 // loop_exit
      _
    %1074 = vsyncpa [#allocation3], 1
    %s1075 = scalar_lea.sflag [#allocation3], 1
    %1076 = vsyncpa %s1075, 1
    %1077 = vsyncpa [#allocation4], 1
    %s1078 = scalar_lea.sflag [#allocation4], 1
    %1079 = vsyncpa %s1078, 1

</llo_original>
